<compile_context>
chip_gen: v7x
topology: tpu7x:2x2x1
jax: 0.10.0
libtpu: 0.0.40
codegen_flags: <defaults>
</compile_context>

<pallas_src>
import functools

import jax
import jax.numpy as jnp
from jax.experimental import pallas as pl
from jax.experimental.pallas import tpu as pltpu


def _ls_ce_kernel(logits_ref, label_ref, loss_ref, cnt_ref,
                  acc_loss, acc_cnt, *,
                  lb_pos, lb_neg, lb_ignore, n_classes, hw, tile_hw,
                  inner_j, needs_tail_mask, use_mxu):
    p = pl.program_id(1)          # spatial-parallel chunk
    j = pl.program_id(2)          # reduction axis (innermost, "arbitrary")

    @pl.when(j == 0)
    def _():
        acc_loss[...] = jnp.zeros_like(acc_loss)
        acc_cnt[...] = jnp.zeros_like(acc_cnt)

    x = logits_ref[0].astype(jnp.float32)            # (C, T) classes x spatial
    lbl = label_ref[0]                               # (1, T) int32

    # log-softmax pieces over the class (sublane) axis
    m = jnp.max(x, axis=0, keepdims=True)            # (1, T)   XLU
    shifted = x - m                                  # (C, T)
    e = jnp.exp(shifted)                             # (C, T)   EUP

    # smoothed-label weights: lb_pos on the labelled class, lb_neg elsewhere
    classes = jax.lax.broadcasted_iota(jnp.int32, (n_classes, 1), 0)
    w = jnp.where(classes == lbl, jnp.float32(lb_pos), jnp.float32(lb_neg))
    ws = w * shifted                                 # (C, T)

    if use_mxu:
        # C % 8 == 0: sublane-padding-free blocks -> safe to contract on the
        # otherwise-idle MXU; moves two reductions off the XLU/extended slot.
        ones_row = jnp.ones((1, n_classes), jnp.float32)
        sum_exp = jnp.dot(ones_row, e, preferred_element_type=jnp.float32)
        wsum = jnp.dot(ones_row, ws, preferred_element_type=jnp.float32)
    else:
        sum_exp = jnp.sum(e, axis=0, keepdims=True)  # (1, T)
        wsum = jnp.sum(ws, axis=0, keepdims=True)    # (1, T)

    lse = jnp.log(sum_exp)                           # (1, T)
    k_const = float(lb_pos) + (n_classes - 1) * float(lb_neg)
    row_loss = k_const * lse - wsum                  # (1, T)  (negation folded)

    valid = lbl != lb_ignore
    if needs_tail_mask:
        # mask positions past H*W (ragged tail and/or fully out-of-range
        # duplicate tiles created by the spatial-parallel split)
        lane = jax.lax.broadcasted_iota(jnp.int32, (1, tile_hw), 1)
        remaining = hw - (p * inner_j + j) * tile_hw
        valid = jnp.logical_and(valid, lane < remaining)

    # NaN/Inf from uninitialized padding is dropped by the select, never by a
    # multiply -- keep this invariant.
    acc_loss[...] += jnp.where(valid, row_loss, 0.0)
    acc_cnt[...] += valid.astype(jnp.float32)

    @pl.when(j == pl.num_programs(2) - 1)
    def _():
        loss_ref[0, 0] = jnp.sum(acc_loss[...], axis=1, keepdims=True)  # (1,1)
        cnt_ref[0, 0] = jnp.sum(acc_cnt[...], axis=1, keepdims=True)    # (1,1)


def _vmem_plan():
    """(logits-block target bytes, scoped vmem_limit_bytes), generation-aware."""
    try:
        kind = jax.devices()[0].device_kind.lower()
    except Exception:
        kind = ""
    if "v7" in kind:
        # 64 MiB physical VMEM per TC: keep blocks <= 4 MiB, limit <= 48 MiB.
        return 4 * 1024 * 1024, 48 * 1024 * 1024
    if any(t in kind for t in ("v6", "v5e", "v5 lite", "v5lite")):
        # 128 MiB VMEM: bigger blocks amortize per-step overhead.
        return 6 * 1024 * 1024, 80 * 1024 * 1024
    return 2 * 1024 * 1024, 32 * 1024 * 1024          # conservative default


def _pick_tile_hw(n_classes, hw, target_bytes):
    """Spatial tile so that a (C, tile_hw) f32 block is ~target_bytes."""
    cols = max(128, target_bytes // (4 * max(n_classes, 1)))
    cols = (cols // 128) * 128
    if cols >= hw:
        return hw            # one full-extent tile
    return cols


def label_smooth_softmax_ce(logits, label, *, lb_pos=0.9, lb_neg=0.005,
                            reduction='mean', lb_ignore=255,
                            tile_hw=None, spatial_parallel=2):
    """logits: (N, C, H, W) float32/bfloat16; label: (N, H, W) int."""
    if reduction != 'mean':
        # TODO(synk): reduction='none' (per-pixel loss output) not wired up;
        # the default 'mean' reduction is implemented fully in-kernel.
        raise NotImplementedError("only reduction='mean' is implemented")

    N, C, H, W = logits.shape
    HW = H * W

    # free reshapes only -- keep native NCHW layout (no transpose / padding);
    # bf16 logits are passed through unchanged (upcast happens in-kernel).
    logits3d = logits.reshape(N, C, HW)
    label3d = label.reshape(N, 1, HW).astype(jnp.int32)

    target_bytes, vmem_limit = _vmem_plan()
    if tile_hw is None:
        tile_hw = _pick_tile_hw(C, HW, target_bytes)
    tile_hw = min(int(tile_hw), HW)
    if tile_hw < HW:
        tile_hw = max(128, (tile_hw // 128) * 128)   # lane-aligned partial tiles

    num_tiles = pl.cdiv(HW, tile_hw)                 # real spatial tiles
    P = max(1, min(int(spatial_parallel), num_tiles))  # v7x: 2 TCs per chip
    J = pl.cdiv(num_tiles, P)                        # inner (reduction) extent
    last_tile = num_tiles - 1

    needs_tail_mask = (P * J * tile_hw != HW) or (HW % 128 != 0)
    use_mxu = (C % 8 == 0)

    if P * J == num_tiles:
        def spatial_map(n, p, j):
            return (n, 0, p * J + j)
    else:
        def spatial_map(n, p, j):                    # clamp duplicate tail tiles
            return (n, 0, jnp.minimum(p * J + j, last_tile))

    kernel = functools.partial(
        _ls_ce_kernel, lb_pos=float(lb_pos), lb_neg=float(lb_neg),
        lb_ignore=int(lb_ignore), n_classes=C, hw=HW, tile_hw=tile_hw,
        inner_j=J, needs_tail_mask=needs_tail_mask, use_mxu=use_mxu)

    loss_parts, cnt_parts = pl.pallas_call(
        kernel,
        out_shape=(jax.ShapeDtypeStruct((N, P, 1, 1), jnp.float32),
                   jax.ShapeDtypeStruct((N, P, 1, 1), jnp.float32)),
        grid_spec=pltpu.PrefetchScalarGridSpec(
            num_scalar_prefetch=0,
            grid=(N, P, J),
            in_specs=[
                pl.BlockSpec((1, C, tile_hw), spatial_map),
                pl.BlockSpec((1, 1, tile_hw), spatial_map),
            ],
            out_specs=[
                pl.BlockSpec((1, 1, 1, 1), lambda n, p, j: (n, p, 0, 0)),
                pl.BlockSpec((1, 1, 1, 1), lambda n, p, j: (n, p, 0, 0)),
            ],
            scratch_shapes=[pltpu.VMEM((1, tile_hw), jnp.float32),
                            pltpu.VMEM((1, tile_hw), jnp.float32)],
        ),
        compiler_params=pltpu.CompilerParams(
            dimension_semantics=("parallel", "parallel", "arbitrary"),
            vmem_limit_bytes=vmem_limit),
    )(logits3d, label3d)

    loss_sum = jnp.sum(loss_parts)
    n_valid = jnp.sum(cnt_parts)
    # NOTE: matches the reference (and PyTorch module): NaN/Inf if every
    # pixel carries the ignore label (n_valid == 0).
    return loss_sum / n_valid


def _reference(logits, label, lb_pos=0.9, lb_neg=0.005, lb_ignore=255):
    logs = jax.nn.log_softmax(logits.astype(jnp.float32), axis=1)
    valid = label != lb_ignore
    lbl = jnp.where(valid, label, 0)
    one_hot = jax.nn.one_hot(lbl, logits.shape[1], axis=1, dtype=jnp.float32)
    sm = lb_pos * one_hot + lb_neg * (1.0 - one_hot)
    sm = jnp.where(valid[:, None, :, :], sm, 0.0)
    return -jnp.sum(logs * sm) / jnp.sum(valid)


if __name__ == "__main__":
    key = jax.random.PRNGKey(0)
    k1, k2 = jax.random.split(key)

    N, C, H, W = 2, 4, 16, 16
    logits = jax.random.normal(k1, (N, C, H, W), dtype=jnp.float32)
    label = jax.random.randint(k2, (N, H, W), 0, C, dtype=jnp.int32)
    # sprinkle in some ignored pixels (value 255)
    ignore_mask = jax.random.bernoulli(k2, 0.1, (N, H, W))
    label = jnp.where(ignore_mask, jnp.int32(255), label)

    loss = label_smooth_softmax_ce(logits, label)
    loss = jax.block_until_ready(loss)

    ref = _reference(logits, label)
    assert jnp.allclose(loss, ref, atol=1e-5, rtol=1e-5), (loss, ref)

    print("KERNEL_OK")
</pallas_src>

<mosaic_0001>
module attributes {stable_mosaic.version = 11 : i64} {
  func.func @_ls_ce_kernel(%arg0: i32, %arg1: i32, %arg2: i32, %arg3: memref<1x4x256xf32, #tpu.memory_space<vmem>>, %arg4: memref<1x1x256xi32, #tpu.memory_space<vmem>>, %arg5: memref<1x1x1x1xf32, #tpu.memory_space<vmem>>, %arg6: memref<1x1x1x1xf32, #tpu.memory_space<vmem>>, %arg7: memref<1x256xf32, #tpu.memory_space<vmem>>, %arg8: memref<1x256xf32, #tpu.memory_space<vmem>>) attributes {dimension_semantics = [#tpu.dimension_semantics<parallel>, #tpu.dimension_semantics<parallel>, #tpu.dimension_semantics<arbitrary>], iteration_bounds = array<i64: 2, 1, 1>, scalar_prefetch = 0 : i64, scratch_operands = 2 : i64, tpu.core_type = #tpu.core_type<tc>, window_params = [{transform_indices = @transform_0, window_bounds = array<i64: 1, 4, 256>}, {transform_indices = @transform_1, window_bounds = array<i64: 1, 1, 256>}, {transform_indices = @transform_2, window_bounds = array<i64: 1, 1, 1, 1>}, {transform_indices = @transform_3, window_bounds = array<i64: 1, 1, 1, 1>}]} {
    %c0_i32 = arith.constant 0 : i32
    %0 = arith.cmpi eq, %arg2, %c0_i32 : i32
    %1 = arith.extui %0 : i1 to i32
    %c0_i32_0 = arith.constant 0 : i32
    %2 = arith.cmpi ne, %1, %c0_i32_0 : i32
    scf.if %2 {
      %cst_22 = arith.constant 0.000000e+00 : f32
      %43 = vector.broadcast %cst_22 : f32 to vector<1x256xf32>
      %c0_23 = arith.constant 0 : index
      %c0_24 = arith.constant 0 : index
      %44 = vector.load %arg7[%c0_23, %c0_24] : memref<1x256xf32, #tpu.memory_space<vmem>>, vector<1x256xf32>
      tpu.vector_store %arg7[%c0_23, %c0_24], %43 {strides = array<i32>} : memref<1x256xf32, #tpu.memory_space<vmem>>, vector<1x256xf32>,
      %cst_25 = arith.constant 0.000000e+00 : f32
      %45 = vector.broadcast %cst_25 : f32 to vector<1x256xf32>
      %c0_26 = arith.constant 0 : index
      %c0_27 = arith.constant 0 : index
      %46 = vector.load %arg8[%c0_26, %c0_27] : memref<1x256xf32, #tpu.memory_space<vmem>>, vector<1x256xf32>
      tpu.vector_store %arg8[%c0_26, %c0_27], %45 {strides = array<i32>} : memref<1x256xf32, #tpu.memory_space<vmem>>, vector<1x256xf32>,
    } else {
    }
    %c0 = arith.constant 0 : index
    %c0_1 = arith.constant 0 : index
    %c0_2 = arith.constant 0 : index
    %3 = vector.load %arg3[%c0, %c0_1, %c0_2] : memref<1x4x256xf32, #tpu.memory_space<vmem>>, vector<1x4x256xf32>
    %4 = vector.shape_cast %3 : vector<1x4x256xf32> to vector<4x256xf32>
    %c0_3 = arith.constant 0 : index
    %c0_4 = arith.constant 0 : index
    %c0_5 = arith.constant 0 : index
    %5 = vector.load %arg4[%c0_3, %c0_4, %c0_5] : memref<1x1x256xi32, #tpu.memory_space<vmem>>, vector<1x1x256xi32>
    %6 = vector.shape_cast %5 : vector<1x1x256xi32> to vector<1x256xi32>
    %cst = arith.constant dense<0xFF800000> : vector<256xf32>
    %7 = vector.multi_reduction <maximumf>, %4, %cst [0] : vector<4x256xf32> to vector<256xf32>
    %8 = vector.shape_cast %7 : vector<256xf32> to vector<1x256xf32>
    %9 = vector.broadcast %8 : vector<1x256xf32> to vector<4x256xf32>
    %10 = arith.subf %4, %9 : vector<4x256xf32>
    %11 = math.exp %10 : vector<4x256xf32>
    %12 = tpu.iota {dimensions = array<i32: 0>} : vector<4x1xi32>
    %13 = vector.broadcast %12 : vector<4x1xi32> to vector<4x256xi32>
    %14 = vector.broadcast %6 : vector<1x256xi32> to vector<4x256xi32>
    %15 = arith.cmpi eq, %13, %14 : vector<4x256xi32>
    %cst_6 = arith.constant 0.899999976 : f32
    %cst_7 = arith.constant 5.000000e-03 : f32
    %16 = vector.broadcast %cst_6 : f32 to vector<4x256xf32>
    %17 = vector.broadcast %cst_7 : f32 to vector<4x256xf32>
    %18 = arith.select %15, %16, %17 : vector<4x256xi1>, vector<4x256xf32>
    %19 = arith.mulf %18, %10 : vector<4x256xf32>
    %cst_8 = arith.constant dense<0.000000e+00> : vector<256xf32>
    %20 = vector.multi_reduction <add>, %11, %cst_8 [0] : vector<4x256xf32> to vector<256xf32>
    %21 = vector.shape_cast %20 : vector<256xf32> to vector<1x256xf32>
    %cst_9 = arith.constant dense<0.000000e+00> : vector<256xf32>
    %22 = vector.multi_reduction <add>, %19, %cst_9 [0] : vector<4x256xf32> to vector<256xf32>
    %23 = vector.shape_cast %22 : vector<256xf32> to vector<1x256xf32>
    %24 = math.log %21 : vector<1x256xf32>
    %cst_10 = arith.constant 9.150000e-01 : f32
    %25 = vector.broadcast %cst_10 : f32 to vector<1x256xf32>
    %26 = arith.mulf %25, %24 : vector<1x256xf32>
    %27 = arith.subf %26, %23 : vector<1x256xf32>
    %c255_i32 = arith.constant 255 : i32
    %28 = vector.broadcast %c255_i32 : i32 to vector<1x256xi32>
    %29 = arith.cmpi ne, %6, %28 : vector<1x256xi32>
    %c0_11 = arith.constant 0 : index
    %c0_12 = arith.constant 0 : index
    %30 = vector.load %arg7[%c0_11, %c0_12] : memref<1x256xf32, #tpu.memory_space<vmem>>, vector<1x256xf32>
    %cst_13 = arith.constant 0.000000e+00 : f32
    %31 = vector.broadcast %cst_13 : f32 to vector<1x256xf32>
    %32 = arith.select %29, %27, %31 : vector<1x256xi1>, vector<1x256xf32>
    %33 = arith.addf %30, %32 : vector<1x256xf32>
    %c0_14 = arith.constant 0 : index
    %c0_15 = arith.constant 0 : index
    %34 = vector.load %arg7[%c0_14, %c0_15] : memref<1x256xf32, #tpu.memory_space<vmem>>, vector<1x256xf32>
    tpu.vector_store %arg7[%c0_14, %c0_15], %33 {strides = array<i32>} : memref<1x256xf32, #tpu.memory_space<vmem>>, vector<1x256xf32>,
    %c0_16 = arith.constant 0 : index
    %c0_17 = arith.constant 0 : index
    %35 = vector.load %arg8[%c0_16, %c0_17] : memref<1x256xf32, #tpu.memory_space<vmem>>, vector<1x256xf32>
    %36 = arith.extui %29 : vector<1x256xi1> to vector<1x256xi32>
    %37 = arith.sitofp %36 : vector<1x256xi32> to vector<1x256xf32>
    %38 = arith.addf %35, %37 : vector<1x256xf32>
    %c0_18 = arith.constant 0 : index
    %c0_19 = arith.constant 0 : index
    %39 = vector.load %arg8[%c0_18, %c0_19] : memref<1x256xf32, #tpu.memory_space<vmem>>, vector<1x256xf32>
    tpu.vector_store %arg8[%c0_18, %c0_19], %38 {strides = array<i32>} : memref<1x256xf32, #tpu.memory_space<vmem>>, vector<1x256xf32>,
    %c0_i32_20 = arith.constant 0 : i32
    %40 = arith.cmpi eq, %arg2, %c0_i32_20 : i32
    %41 = arith.extui %40 : i1 to i32
    %c0_i32_21 = arith.constant 0 : i32
    %42 = arith.cmpi ne, %41, %c0_i32_21 : i32
    scf.if %42 {
      %c0_22 = arith.constant 0 : index
      %c0_23 = arith.constant 0 : index
      %43 = vector.load %arg7[%c0_22, %c0_23] : memref<1x256xf32, #tpu.memory_space<vmem>>, vector<1x256xf32>
      %cst_24 = arith.constant dense<0.000000e+00> : vector<1xf32>
      %44 = vector.multi_reduction <add>, %43, %cst_24 [1] : vector<1x256xf32> to vector<1xf32>
      %45 = vector.shape_cast %44 : vector<1xf32> to vector<1x1xf32>
      %c0_25 = arith.constant 0 : index
      %c0_26 = arith.constant 0 : index
      %c0_27 = arith.constant 0 : index
      %c0_28 = arith.constant 0 : index
      %46 = vector.load %arg5[%c0_25, %c0_26, %c0_27, %c0_28] : memref<1x1x1x1xf32, #tpu.memory_space<vmem>>, vector<1x1x1x1xf32>
      %47 = vector.shape_cast %46 : vector<1x1x1x1xf32> to vector<1x1xf32>
      %48 = vector.shape_cast %45 : vector<1x1xf32> to vector<1x1x1x1xf32>
      tpu.vector_store %arg5[%c0_25, %c0_26, %c0_27, %c0_28], %48 {strides = array<i32>} : memref<1x1x1x1xf32, #tpu.memory_space<vmem>>, vector<1x1x1x1xf32>,
      %c0_29 = arith.constant 0 : index
      %c0_30 = arith.constant 0 : index
      %49 = vector.load %arg8[%c0_29, %c0_30] : memref<1x256xf32, #tpu.memory_space<vmem>>, vector<1x256xf32>
      %cst_31 = arith.constant dense<0.000000e+00> : vector<1xf32>
      %50 = vector.multi_reduction <add>, %49, %cst_31 [1] : vector<1x256xf32> to vector<1xf32>
      %51 = vector.shape_cast %50 : vector<1xf32> to vector<1x1xf32>
      %c0_32 = arith.constant 0 : index
      %c0_33 = arith.constant 0 : index
      %c0_34 = arith.constant 0 : index
      %c0_35 = arith.constant 0 : index
      %52 = vector.load %arg6[%c0_32, %c0_33, %c0_34, %c0_35] : memref<1x1x1x1xf32, #tpu.memory_space<vmem>>, vector<1x1x1x1xf32>
      %53 = vector.shape_cast %52 : vector<1x1x1x1xf32> to vector<1x1xf32>
      %54 = vector.shape_cast %51 : vector<1x1xf32> to vector<1x1x1x1xf32>
      tpu.vector_store %arg6[%c0_32, %c0_33, %c0_34, %c0_35], %54 {strides = array<i32>} : memref<1x1x1x1xf32, #tpu.memory_space<vmem>>, vector<1x1x1x1xf32>,
    } else {
    }
    return
  }
  func.func @transform_0(%arg0: i32, %arg1: i32, %arg2: i32) -> (i32, i32, i32) {
    %c1_i32 = arith.constant 1 : i32
    %0 = arith.muli %arg1, %c1_i32 : i32
    %1 = arith.addi %0, %arg2 : i32
    %c0_i32 = arith.constant 0 : i32
    %c0_i32_0 = arith.constant 0 : i32
    return %arg0, %c0_i32, %1 : i32, i32, i32
  }
  func.func @transform_1(%arg0: i32, %arg1: i32, %arg2: i32) -> (i32, i32, i32) {
    %c1_i32 = arith.constant 1 : i32
    %0 = arith.muli %arg1, %c1_i32 : i32
    %1 = arith.addi %0, %arg2 : i32
    %c0_i32 = arith.constant 0 : i32
    %c0_i32_0 = arith.constant 0 : i32
    return %arg0, %c0_i32, %1 : i32, i32, i32
  }
  func.func @transform_2(%arg0: i32, %arg1: i32, %arg2: i32) -> (i32, i32, i32, i32) {
    %c0_i32 = arith.constant 0 : i32
    %c0_i32_0 = arith.constant 0 : i32
    %c0_i32_1 = arith.constant 0 : i32
    return %arg0, %arg1, %c0_i32, %c0_i32_0 : i32, i32, i32, i32
  }
  func.func @transform_3(%arg0: i32, %arg1: i32, %arg2: i32) -> (i32, i32, i32, i32) {
    %c0_i32 = arith.constant 0 : i32
    %c0_i32_0 = arith.constant 0 : i32
    %c0_i32_1 = arith.constant 0 : i32
    return %arg0, %arg1, %c0_i32, %c0_i32_0 : i32, i32, i32, i32
  }
}

</mosaic_0001>

<llo_original>
// kernel: tpu_custom_call.1
$region0: #{tpu_custom_call.1}
  #allocation0 [shape = 'u32[]', space=smem, size = 0x4, offset = 0x4, fixed_abs, tag = 'smem constant byte address 0x4 - core index']
  #allocation1 [shape = 'u32[144,128]{1,0:T(1,128)}', space=vmem, size = 0x12000, scoped, tag = 'internal scratch']
  #allocation2 [shape = 'f32[1,256]{1,0:T(1,128)}', space=vmem, size = 0x400, scoped, tag = 'scratch operand']
  #allocation3 [shape = 'f32[1,256]{1,0:T(1,128)}', space=vmem, size = 0x400, scoped, tag = 'scratch operand']
  %s0 = inlined_call_operand.hbm [shape: f32[2,4,256], index: 0, kind: input, shape index: {}]
  %s1 = inlined_call_operand.hbm [shape: s32[2,1,256], index: 1, kind: input, shape index: {}]
  %s2 = inlined_call_operand.vmem [shape: f32[2,1,1,1], index: 2, kind: output, shape index: {0}]
  %s3 = inlined_call_operand.vmem [shape: f32[2,1,1,1], index: 3, kind: output, shape index: {1}]
  %4 = xla_tuple %s2, %s3
  %s5 = sld [smem:[#allocation0]]
  $region65: #{tpu_custom_call.1} parent=0
    _
  %s7 = ssub.s32 1, %s5
  %s8 = scalar_select 0, %s7, %s5
  $region1: #{tpu_custom_call.1} parent=0
    #allocation4 [shape = 'u8[8192]{0}', space=vmem, size = 0x2000, scoped, tag = 'input window, operand 0']
    #allocation5 [shape = 's32[2]{0}', space=sflag, size = 0x8, scoped, tag = 'scoped memory for tpu_custom_call.1']
    #allocation6 [shape = 'u8[2048]{0}', space=vmem, size = 0x800, scoped, tag = 'input window, operand 1']
    #allocation7 [shape = 's32[2]{0}', space=sflag, size = 0x8, scoped, tag = 'scoped memory for tpu_custom_call.1']
    %9 = vsyncpa [#allocation5], 0
    %s10 = scalar_lea.sflag [#allocation5], 1
    %11 = vsyncpa %s10, 0
    %12 = vsyncpa [#allocation7], 0
    %s13 = scalar_lea.sflag [#allocation7], 1
    %14 = vsyncpa %s13, 0
    loop: start=0, step=1, limit=4
    $region2: #{tpu_custom_call.1} parent=1 // loop_pre_header
      _
    $region3: #{tpu_custom_call.1} parent=1 // loop_header
      %s16 = sphi 0, %s20
      %p17 = scmp.ge.s32.totalorder %s16, 4
      %s23 = sphi 0, %s42
      %s24 = sphi 0, %s38
      %s25 = sphi 0, %s34
      %s26 = sphi 0, %s23
      %s27 = sphi 0, %s24
      %s28 = sphi 0, %s25
      %s29 = sphi 0, %s26
      %s30 = sphi 0, %s27
      %s31 = sphi 0, %s28
      %s49 = sphi 0, %s51
      %s52 = sphi 0, %s49
      %s53 = sphi 0, %s52
      %s69 = sphi 0, %s53
      %s79 = sphi 0, %s81
      %s82 = sphi 0, %s79
      %s83 = sphi 0, %s82
      %s99 = sphi 0, %s83
      %s107 = sphi 0, %s109
      %s110 = sphi 0, %s107
      %s111 = sphi 0, %s110
      %s127 = sphi 0, %s111
      %s135 = sphi 0, %s137
      %s138 = sphi 0, %s135
      %s139 = sphi 0, %s138
      %s155 = sphi 0, %s139
    $region4: #{tpu_custom_call.1} parent=1 // loop_header_branch
      %19 = sbr.rel (%p17) target = $region8
    $region5: #{tpu_custom_call.1} parent=1 // loop_body
      %s21 = ssub.s32 %s16, 1
      %s22 = ssub.s32 %s16, 2
      %s32 = sadd.s32 1, %s25
      %p33 = scmp.ge.s32.totalorder %s32, 1
      %s34 = scalar_select %p33, 0, %s32
      %s35 = sadd.s32 1, %s24
      %s36 = scalar_select %p33, %s35, %s24
      %p37 = scmp.ge.s32.totalorder %s36, 1
      %s38 = scalar_select %p37, 0, %s36
      %s39 = sadd.s32 1, %s23
      %s40 = scalar_select %p37, %s39, %s23
      %p41 = scmp.ge.s32.totalorder %s40, 2
      %s42 = scalar_select %p41, 0, %s40
      %s43 = sadd.s32 %s24, %s25
      %s44 = sadd.s32 %s38, %s34
      %s45 = ssub.s32 %s23, %s42
      %s46 = ssub.s32 %s43, %s44
      %s47 = sor.u32 %s45, %s46
      %p48 = scmp.eq.s32.totalorder %s47, 0
      %s50 = sadd.s32 %s49, 1
      %s51 = scalar_select %p48, %s49, %s50
      %p54 = pneg %p48
      %p55 = scmp.eq.s32.totalorder %s16, 1
      %p56 = por %p54, %p55
      %p57 = scmp.ne.s32.totalorder %s49, %s52
      %p58 = scmp.eq.s32.totalorder %s16, 0
      %p59 = por %p57, %p58
      %p60 = scmp.ne.s32.totalorder %s49, %s52
      %p61 = scmp.eq.s32.totalorder %s21, 1
      %p62 = por %p60, %p61
      %p63 = scmp.ne.s32.totalorder %s52, %s53
      %p64 = scmp.eq.s32.totalorder %s21, 0
      %p65 = por %p63, %p64
      %p66 = scmp.ne.s32.totalorder %s52, %s53
      %p67 = scmp.eq.s32.totalorder %s22, 1
      %p68 = por %p66, %p67
      %p70 = scmp.ne.s32.totalorder %s53, %s69
      %p71 = scmp.eq.s32.totalorder %s22, 0
      %p72 = por %p70, %p71
      %s73 = sadd.s32 %s24, %s25
      %s74 = sadd.s32 %s38, %s34
      %s75 = ssub.s32 %s23, %s42
      %s76 = ssub.s32 %s73, %s74
      %s77 = sor.u32 %s75, %s76
      %p78 = scmp.eq.s32.totalorder %s77, 0
      %s80 = sadd.s32 %s79, 1
      %s81 = scalar_select %p78, %s79, %s80
      %p84 = pneg %p78
      %p85 = scmp.eq.s32.totalorder %s16, 1
      %p86 = por %p84, %p85
      %p87 = scmp.ne.s32.totalorder %s79, %s82
      %p88 = scmp.eq.s32.totalorder %s16, 0
      %p89 = por %p87, %p88
      %p90 = scmp.ne.s32.totalorder %s79, %s82
      %p91 = scmp.eq.s32.totalorder %s21, 1
      %p92 = por %p90, %p91
      %p93 = scmp.ne.s32.totalorder %s82, %s83
      %p94 = scmp.eq.s32.totalorder %s21, 0
      %p95 = por %p93, %p94
      %p96 = scmp.ne.s32.totalorder %s82, %s83
      %p97 = scmp.eq.s32.totalorder %s22, 1
      %p98 = por %p96, %p97
      %p100 = scmp.ne.s32.totalorder %s83, %s99
      %p101 = scmp.eq.s32.totalorder %s22, 0
      %p102 = por %p100, %p101
      %s103 = ssub.s32 %s23, %s42
      %s104 = ssub.s32 %s24, %s38
      %s105 = sor.u32 %s103, %s104
      %p106 = scmp.eq.s32.totalorder %s105, 0
      %s108 = sadd.s32 %s107, 1
      %s109 = scalar_select %p106, %s107, %s108
      %p112 = pneg %p106
      %p113 = scmp.eq.s32.totalorder %s16, 1
      %p114 = por %p112, %p113
      %p115 = scmp.ne.s32.totalorder %s107, %s110
      %p116 = scmp.eq.s32.totalorder %s16, 0
      %p117 = por %p115, %p116
      %p118 = scmp.ne.s32.totalorder %s107, %s110
      %p119 = scmp.eq.s32.totalorder %s21, 1
      %p120 = por %p118, %p119
      %p121 = scmp.ne.s32.totalorder %s110, %s111
      %p122 = scmp.eq.s32.totalorder %s21, 0
      %p123 = por %p121, %p122
      %p124 = scmp.ne.s32.totalorder %s110, %s111
      %p125 = scmp.eq.s32.totalorder %s22, 1
      %p126 = por %p124, %p125
      %p128 = scmp.ne.s32.totalorder %s111, %s127
      %p129 = scmp.eq.s32.totalorder %s22, 0
      %p130 = por %p128, %p129
      %s131 = ssub.s32 %s23, %s42
      %s132 = ssub.s32 %s24, %s38
      %s133 = sor.u32 %s131, %s132
      %p134 = scmp.eq.s32.totalorder %s133, 0
      %s136 = sadd.s32 %s135, 1
      %s137 = scalar_select %p134, %s135, %s136
      %p140 = pneg %p134
      %p141 = scmp.eq.s32.totalorder %s16, 1
      %p142 = por %p140, %p141
      %p143 = scmp.ne.s32.totalorder %s135, %s138
      %p144 = scmp.eq.s32.totalorder %s16, 0
      %p145 = por %p143, %p144
      %p146 = scmp.ne.s32.totalorder %s135, %s138
      %p147 = scmp.eq.s32.totalorder %s21, 1
      %p148 = por %p146, %p147
      %p149 = scmp.ne.s32.totalorder %s138, %s139
      %p150 = scmp.eq.s32.totalorder %s21, 0
      %p151 = por %p149, %p150
      %p152 = scmp.ne.s32.totalorder %s138, %s139
      %p153 = scmp.eq.s32.totalorder %s22, 1
      %p154 = por %p152, %p153
      %p156 = scmp.ne.s32.totalorder %s139, %s155
      %p157 = scmp.eq.s32.totalorder %s22, 0
      %p158 = por %p156, %p157
      %p159 = scmp.le.s32.totalorder 1, %s16
      %p160 = scmp.lt.s32.totalorder %s16, 3
      %p161 = pnand %p159, %p160
      %p162 = pneg %p161
      // Predicated region
      $region9: #{tpu_custom_call.1} parent=5 // pred_check
        _
      $region10: #{tpu_custom_call.1} parent=5 // pred_check_branch
        %164 = sbr.rel (%p161) target = $region12
      $region11: #{tpu_custom_call.1} parent=5 // pred_region
        %s165 = ssub.s32 %s16, 1
      $region12: #{tpu_custom_call.1} parent=5 // pred_fallthru
        _
      %p166 = scmp.lt.s32.totalorder %s16, 2
      // Predicated region
      $region13: #{tpu_custom_call.1} parent=5 // pred_check
        %p167 = pneg %p166
      $region14: #{tpu_custom_call.1} parent=5 // pred_check_branch
        %169 = sbr.rel (%p167) target = $region16
      $region15: #{tpu_custom_call.1} parent=5 // pred_region
        // Predicated region
        $region17: #{tpu_custom_call.1} parent=15 // pred_check
          %p170 = pneg %p59
        $region18: #{tpu_custom_call.1} parent=15 // pred_check_branch
          %172 = sbr.rel (%p170) target = $region20
        $region19: #{tpu_custom_call.1} parent=15 // pred_region
          %s173 = sand.u32 %s49, 1
          %s174 = scalar_lea.sflag [#allocation5], %s173
          %s175 = sand.u32 %s49, 1
          %s176 = smul.addr %s175, 8
          %s177 = scalar_lea.vmem [#allocation4], %s176
          %s178 = sadd.s32 %s24, %s25
          %s179 = smul.u32 2, %s178
          %s181 = ssub.s32 128, 128
          %182 = vsyncadd %s174, %s181
          %s183 = smul.addr %s23, 2
          %s184 = sadd.s32 %s179, %s183
          %s185 = smul.addr %s184, 64
          %s186 = scalar_lea.hbm %s0, %s185
          %s188 = sshll.u32 %s177, 4
          %s189 = int_to_ptr.vmem [resolvable:$true] %s188
          %191 = dma.hbm_to_vmem [thread:$0]  %s186, 128, %s189, %s174
        $region20: #{tpu_custom_call.1} parent=15 // pred_fallthru
          _
        // Predicated region
        $region21: #{tpu_custom_call.1} parent=15 // pred_check
          %p192 = pneg %p89
        $region22: #{tpu_custom_call.1} parent=15 // pred_check_branch
          %194 = sbr.rel (%p192) target = $region24
        $region23: #{tpu_custom_call.1} parent=15 // pred_region
          %s195 = sand.u32 %s79, 1
          %s196 = scalar_lea.sflag [#allocation7], %s195
          %s197 = sand.u32 %s79, 1
          %s198 = smul.addr %s197, 2
          %s199 = scalar_lea.vmem [#allocation6], %s198
          %s200 = sadd.s32 %s24, %s25
          %s201 = smul.u32 2, %s200
          %s203 = ssub.s32 32, 32
          %204 = vsyncadd %s196, %s203
          %s205 = smul.addr %s23, 2
          %s206 = sadd.s32 %s201, %s205
          %s207 = smul.addr %s206, 16
          %s208 = scalar_lea.hbm %s1, %s207
          %s210 = sshll.u32 %s199, 4
          %s211 = int_to_ptr.vmem [resolvable:$true] %s210
          %213 = dma.hbm_to_vmem [thread:$0]  %s208, 32, %s211, %s196
        $region24: #{tpu_custom_call.1} parent=15 // pred_fallthru
          _
      $region16: #{tpu_custom_call.1} parent=5 // pred_fallthru
        _
      %p214 = scmp.le.s32.totalorder 1, %s16
      %p215 = scmp.lt.s32.totalorder %s16, 3
      %p216 = pnand %p214, %p215
      %p217 = pneg %p216
      // Predicated region
      $region25: #{tpu_custom_call.1} parent=5 // pred_check
        _
      $region26: #{tpu_custom_call.1} parent=5 // pred_check_branch
        %219 = sbr.rel (%p216) target = $region28
      $region27: #{tpu_custom_call.1} parent=5 // pred_region
        %s220 = ssub.s32 %s16, 1
        %s221 = sand.u32 %s52, 1
        %s222 = scalar_lea.sflag [#allocation5], %s221
        %s223 = sand.u32 %s52, 1
        %s224 = smul.addr %s223, 8
        %s225 = scalar_lea.vmem [#allocation4], %s224
        // Predicated region
        $region29: #{tpu_custom_call.1} parent=27 // pred_check
          %p226 = pneg %p65
        $region30: #{tpu_custom_call.1} parent=27 // pred_check_branch
          %228 = sbr.rel (%p226) target = $region32
        $region31: #{tpu_custom_call.1} parent=27 // pred_region
          %229 = dma.done %s222, 128
        $region32: #{tpu_custom_call.1} parent=27 // pred_fallthru
          _
        %s230 = sand.u32 %s82, 1
        %s231 = scalar_lea.sflag [#allocation7], %s230
        %s232 = sand.u32 %s82, 1
        %s233 = smul.addr %s232, 2
        %s234 = scalar_lea.vmem [#allocation6], %s233
        // Predicated region
        $region33: #{tpu_custom_call.1} parent=27 // pred_check
          %p235 = pneg %p95
        $region34: #{tpu_custom_call.1} parent=27 // pred_check_branch
          %237 = sbr.rel (%p235) target = $region36
        $region35: #{tpu_custom_call.1} parent=27 // pred_region
          %238 = dma.done %s231, 32
        $region36: #{tpu_custom_call.1} parent=27 // pred_fallthru
          _
        %s239 = sand.u32 %s52, 1
        %s240 = scalar_lea.sflag [#allocation5], %s239
        %s241 = sand.u32 %s52, 1
        %s242 = smul.addr %s241, 8
        %s243 = scalar_lea.vmem [#allocation4], %s242
        %p244 = pneg %p65
        %p245 = pneg %p62
        %s246 = sand.u32 %s82, 1
        %s247 = scalar_lea.sflag [#allocation7], %s246
        %s248 = sand.u32 %s82, 1
        %s249 = smul.addr %s248, 2
        %s250 = scalar_lea.vmem [#allocation6], %s249
        %p251 = pneg %p95
        %p252 = pneg %p92
        %p253 = pneg %p123
        %p254 = pneg %p120
        %p255 = scmp.lt.s32.totalorder %s26, 1
        %s256 = scalar_select %p255, %s26, 1
        %p257 = scmp.lt.s32.totalorder %s27, 0
        %s258 = scalar_select %p257, %s27, 0
        %s259 = sadd.s32 %s258, %s256
        %s260 = scalar_lea.vmem %s2, %s259
        %p261 = pneg %p151
        %p262 = pneg %p148
        %p263 = scmp.lt.s32.totalorder %s26, 1
        %s264 = scalar_select %p263, %s26, 1
        %p265 = scmp.lt.s32.totalorder %s27, 0
        %s266 = scalar_select %p265, %s27, 0
        %s267 = sadd.s32 %s266, %s264
        %s268 = scalar_lea.vmem %s3, %s267
        %s269 = sadd.s32 %s27, %s28
        %s270 = smul.u32 2, %s269
        %s271 = sadd.s32 %s27, %s28
        %s272 = smul.u32 2, %s271
        %p273 = scmp.lt.s32.totalorder %s26, 1
        %s274 = scalar_select %p273, %s26, 1
        %p275 = scmp.lt.s32.totalorder %s27, 0
        %s276 = scalar_select %p275, %s27, 0
        %s277 = sadd.s32 %s276, %s274
        %s278 = scalar_lea.vmem %s2, %s277
        %p279 = scmp.lt.s32.totalorder %s26, 1
        %s280 = scalar_select %p279, %s26, 1
        %p281 = scmp.lt.s32.totalorder %s27, 0
        %s282 = scalar_select %p281, %s27, 0
        %s283 = sadd.s32 %s282, %s280
        %s284 = scalar_lea.vmem %s3, %s283
        %p285 = scmp.eq.s32.totalorder %s28, 0
        // Predicated region
        $region37: #{tpu_custom_call.1} parent=27 // pred_check
          %p286 = pneg %p285
        $region38: #{tpu_custom_call.1} parent=27 // pred_check_branch
          %288 = sbr.rel (%p286) target = $region40
        $region39: #{tpu_custom_call.1} parent=27 // pred_region
          %v289 = vlaneseq
          %vm290 = vcmp.ge.s32.totalorder %v289, 0
          %vm291 = vcmp.lt.s32.totalorder %v289, 256
          %vm292 = vmand %vm290, %vm291
          %293 = vst.msk [vmem:[#allocation2] sm:$0x3] %vm292, 0.0
          %294 = vst.msk [vmem:[#allocation3] sm:$0x3] %vm292, 0.0
        $region40: #{tpu_custom_call.1} parent=27 // pred_fallthru
          _
        %v295 = vld [vmem:[%s225] sm:$0xff]
        %v296 = vld [vmem:[%s234] sm:$0x3]
        %v298 = vcombine.high %v295, %v295
        %vm300 = vcmask 1043456
        %v301 = vsel %vm300, %v295, -inf
        %v302 = vrot.slane %v301, 4
        %v303 = vmax.f32 %v301, %v302
        %v304 = vrot.slane %v303, 2
        %v305 = vmax.f32 %v303, %v304
        %v306 = vrot.slane %v305, 1
        %v307 = vmax.f32 %v305, %v306
        %v308 = vsel %vm300, %v298, -inf
        %v309 = vrot.slane %v308, 4
        %v310 = vmax.f32 %v308, %v309
        %v311 = vrot.slane %v310, 2
        %v312 = vmax.f32 %v310, %v311
        %v313 = vrot.slane %v312, 1
        %v314 = vmax.f32 %v312, %v313
        %v317 = vcombine.low %v307, %v314
        %v319 = vsub.f32 %v295, %v317
        %v320 = vmul.f32 %v319, 1.442695
        %v321 = vpow.pop %v320
        %v322 = vlaneseq
        %v323 = vshrl.u32 %v322, 7
        %v324 = vlaneseq
        %v325 = vshrl.u32 %v324, 7
        %v326 = vsub.s32 0, %v325
        %v327 = vrot.slane %v296, %v326
        %v328 = vlaneseq
        %v329 = vshrl.u32 %v328, 7
        %v330 = vsub.s32 1, %v329
        %v331 = vrot.slane %v296, %v330
        %vm332 = vcmp.eq.s32.totalorder %v323, %v327
        %vm333 = vcmp.eq.s32.totalorder %v323, %v331
        %v334 = vsel %vm332, 0.9, 0.005
        %v335 = vsel %vm333, 0.9, 0.005
        %v337 = vcombine.high %v319, %v319
        %v339 = vmul.f32 %v334, %v319
        %v340 = vmul.f32 %v335, %v337
        %v342 = vcombine.high %v321, %v321
        %v344 = vsel %vm300, %v321, 0.0
        %v345 = vrot.slane %v344, 4
        %v346 = vadd.f32 %v344, %v345
        %v347 = vrot.slane %v346, 2
        %v348 = vadd.f32 %v346, %v347
        %v349 = vrot.slane %v348, 1
        %v350 = vadd.f32 %v348, %v349
        %v351 = vsel %vm300, %v342, 0.0
        %v352 = vrot.slane %v351, 4
        %v353 = vadd.f32 %v351, %v352
        %v354 = vrot.slane %v353, 2
        %v355 = vadd.f32 %v353, %v354
        %v356 = vrot.slane %v355, 1
        %v357 = vadd.f32 %v355, %v356
        %v358 = vsel %vm300, %v339, 0.0
        %v359 = vrot.slane %v358, 4
        %v360 = vadd.f32 %v358, %v359
        %v361 = vrot.slane %v360, 2
        %v362 = vadd.f32 %v360, %v361
        %v363 = vrot.slane %v362, 1
        %v364 = vadd.f32 %v362, %v363
        %v365 = vsel %vm300, %v340, 0.0
        %v366 = vrot.slane %v365, 4
        %v367 = vadd.f32 %v365, %v366
        %v368 = vrot.slane %v367, 2
        %v369 = vadd.f32 %v367, %v368
        %v370 = vrot.slane %v369, 1
        %v371 = vadd.f32 %v369, %v370
        %v372 = vlog2.pop %v350
        %v373 = vmul.f32 %v372, 0.6931472
        %v374 = vlog2.pop %v357
        %v375 = vmul.f32 %v374, 0.6931472
        %v376 = vmul.f32 %v373, 0.915
        %v377 = vmul.f32 %v375, 0.915
        %v378 = vsub.f32 %v376, %v364
        %v379 = vsub.f32 %v377, %v371
        %vm380 = vcmp.ne.s32.totalorder %v296, 255
        %v381 = vld [vmem:[#allocation2] sm:$0x3]
        %v384 = vcombine.low %v378, %v379
        %v386 = vunpack.c.l.s4 1966171168
        %v387 = vunpack.c.0.s8 %v386
        %v388 = vlaneseq
        %v389 = vshrl.u32 %v388, 7
        %v390 = vsub.s32 %v387, %v389
        %v391 = vrot.slane %v384, %v390
        %v393 = vunpack.c.l.s4 1966171168
        %v394 = vunpack.c.0.s8 %v393
        %v395 = vlaneseq
        %v396 = vshrl.u32 %v395, 7
        %v397 = vsub.s32 %v394, %v396
        %v398 = vrot.slane %v391, %v397
        %v400 = vsel %vm380, %v398, 0.0
        %v401 = vadd.f32 %v381, %v400
        %v402 = vlaneseq
        %vm403 = vcmp.ge.s32.totalorder %v402, 0
        %vm404 = vcmp.lt.s32.totalorder %v402, 256
        %vm405 = vmand %vm403, %vm404
        %406 = vst.msk [vmem:[#allocation2] sm:$0x3] %vm405, %v401
        %v407 = vld [vmem:[#allocation3] sm:$0x3]
        %v408 = vsel %vm380, 1, 0
        %v409 = vcvt.s32.f32 %v408
        %v410 = vadd.f32 %v407, %v409
        %411 = vst.msk [vmem:[#allocation3] sm:$0x3] %vm405, %v410
        // Predicated region
        $region41: #{tpu_custom_call.1} parent=27 // pred_check
          %p412 = pneg %p285
        $region42: #{tpu_custom_call.1} parent=27 // pred_check_branch
          %414 = sbr.rel (%p412) target = $region44
        $region43: #{tpu_custom_call.1} parent=27 // pred_region
          %v415 = vld [vmem:[#allocation2] sm:$0x3]
          %v417 = vlaneseq
          %v418 = vshrl.u32 %v417, 7
          %v419 = vsub.s32 0, %v418
          %v420 = vrot.slane %v415, %v419
          %v421 = vlaneseq
          %v422 = vshrl.u32 %v421, 7
          %v423 = vsub.s32 1, %v422
          %v424 = vrot.slane %v415, %v423
          %vm427 = vcmask 1040384
          %v428 = vsel %vm427, %v420, 0.0
          %v429 = vsel %vm427, %v424, 0.0
          %v430 = vadd.f32 %v428, %v429
          %431 = vadd.xlane.f32.xlu0 %v430
          %v432 = vpop.xlane.xlu0 %431
          %vm433 = vcmask 0
          %434 = vst.msk [vmem:[%s278] sm:$0x1] %vm433, %v432
          %v435 = vld [vmem:[#allocation3] sm:$0x3]
          %v437 = vlaneseq
          %v438 = vshrl.u32 %v437, 7
          %v439 = vsub.s32 0, %v438
          %v440 = vrot.slane %v435, %v439
          %v441 = vlaneseq
          %v442 = vshrl.u32 %v441, 7
          %v443 = vsub.s32 1, %v442
          %v444 = vrot.slane %v435, %v443
          %v447 = vsel %vm427, %v440, 0.0
          %v448 = vsel %vm427, %v444, 0.0
          %v449 = vadd.f32 %v447, %v448
          %450 = vadd.xlane.f32.xlu0 %v449
          %v451 = vpop.xlane.xlu0 %450
          %452 = vst.msk [vmem:[%s284] sm:$0x1] %vm433, %v451
        $region44: #{tpu_custom_call.1} parent=27 // pred_fallthru
          _
        %p453 = scmp.lt.s32.totalorder %s26, 1
        %s454 = scalar_select %p453, %s26, 1
        %p455 = scmp.lt.s32.totalorder %s27, 0
        %s456 = scalar_select %p455, %s27, 0
        %s457 = sadd.s32 %s456, %s454
        %s458 = scalar_lea.vmem %s2, %s457
        %p459 = scmp.lt.s32.totalorder %s26, 1
        %s460 = scalar_select %p459, %s26, 1
        %p461 = scmp.lt.s32.totalorder %s27, 0
        %s462 = scalar_select %p461, %s27, 0
        %s463 = sadd.s32 %s462, %s460
        %s464 = scalar_lea.vmem %s3, %s463
        // Predicated region
        $region45: #{tpu_custom_call.1} parent=27 // pred_check
          %p465 = pneg %p120
        $region46: #{tpu_custom_call.1} parent=27 // pred_check_branch
          %467 = sbr.rel (%p465) target = $region48
        $region47: #{tpu_custom_call.1} parent=27 // pred_region
          _
        $region48: #{tpu_custom_call.1} parent=27 // pred_fallthru
          _
        // Predicated region
        $region49: #{tpu_custom_call.1} parent=27 // pred_check
          %p468 = pneg %p148
        $region50: #{tpu_custom_call.1} parent=27 // pred_check_branch
          %470 = sbr.rel (%p468) target = $region52
        $region51: #{tpu_custom_call.1} parent=27 // pred_region
          _
        $region52: #{tpu_custom_call.1} parent=27 // pred_fallthru
          _
      $region28: #{tpu_custom_call.1} parent=5 // pred_fallthru
        _
      %p471 = scmp.le.s32.totalorder 2, %s16
      // Predicated region
      $region53: #{tpu_custom_call.1} parent=5 // pred_check
        %p472 = pneg %p471
      $region54: #{tpu_custom_call.1} parent=5 // pred_check_branch
        %474 = sbr.rel (%p472) target = $region56
      $region55: #{tpu_custom_call.1} parent=5 // pred_region
        %s475 = ssub.s32 %s16, 2
        // Predicated region
        $region57: #{tpu_custom_call.1} parent=55 // pred_check
          %p476 = pneg %p126
        $region58: #{tpu_custom_call.1} parent=55 // pred_check_branch
          %478 = sbr.rel (%p476) target = $region60
        $region59: #{tpu_custom_call.1} parent=55 // pred_region
          %p479 = scmp.lt.s32.totalorder %s29, 1
          %s480 = scalar_select %p479, %s29, 1
          %p481 = scmp.lt.s32.totalorder %s30, 0
          %s482 = scalar_select %p481, %s30, 0
          %s483 = sadd.s32 %s482, %s480
          %s484 = scalar_lea.vmem %s2, %s483
        $region60: #{tpu_custom_call.1} parent=55 // pred_fallthru
          _
        // Predicated region
        $region61: #{tpu_custom_call.1} parent=55 // pred_check
          %p485 = pneg %p154
        $region62: #{tpu_custom_call.1} parent=55 // pred_check_branch
          %487 = sbr.rel (%p485) target = $region64
        $region63: #{tpu_custom_call.1} parent=55 // pred_region
          %p488 = scmp.lt.s32.totalorder %s29, 1
          %s489 = scalar_select %p488, %s29, 1
          %p490 = scmp.lt.s32.totalorder %s30, 0
          %s491 = scalar_select %p490, %s30, 0
          %s492 = sadd.s32 %s491, %s489
          %s493 = scalar_lea.vmem %s3, %s492
        $region64: #{tpu_custom_call.1} parent=55 // pred_fallthru
          _
      $region56: #{tpu_custom_call.1} parent=5 // pred_fallthru
        _
    $region6: #{tpu_custom_call.1} parent=1 // loop_footer
      %s20 = sadd.s32 1, %s16
    $region7: #{tpu_custom_call.1} parent=1 // loop_footer_branch
      %15 = sbr.rel target = $region3
    $region8: #{tpu_custom_call.1} parent=1 // loop_exit
      _
    %494 = vsyncpa [#allocation5], 1
    %s495 = scalar_lea.sflag [#allocation5], 1
    %496 = vsyncpa %s495, 1
    %497 = vsyncpa [#allocation7], 1
    %s498 = scalar_lea.sflag [#allocation7], 1
    %499 = vsyncpa %s498, 1

</llo_original>
